<compile_context>
chip_gen: v7x
topology: tpu7x:2x2x1
jax: 0.10.0
libtpu: 0.0.40
codegen_flags: <defaults>
</compile_context>

<pallas_src>
import math
import functools

import numpy as np
import jax
import jax.numpy as jnp
from jax import lax
from jax.experimental import pallas as pl
from jax.experimental.pallas import tpu as pltpu


# Older jax releases used a different class name; keep a tiny compat shim so the
# kernel still runs there.
_CompilerParams = getattr(pltpu, "CompilerParams", None)
if _CompilerParams is None:  # pragma: no cover
    _CompilerParams = getattr(pltpu, "TPUCompilerParams")


def _row_major_strides(shape):
    strides, acc = [], 1
    for dim in reversed(shape):
        strides.append(acc)
        acc *= dim
    return tuple(reversed(strides))


def _pos_enc_kernel(seed_ref, x_ref, pe_ref, o_ref, *, p, apply_dropout):
    """One sequence tile: y = dropout(x + pe).

    x_ref : (TS, B, D) or (TS, F) VMEM block
    pe_ref: (TS, 1, D) or (TS, F) VMEM block (broadcasts over batch if 3-D)
    seed_ref: (1,) int32 in SMEM
    """
    x = x_ref[...].astype(jnp.float32)
    pe = pe_ref[...].astype(jnp.float32)
    y = x + pe  # numpy broadcasting handles the (TS,1,D) -> (TS,B,D) case

    if apply_dropout:
        shape = y.shape
        # Per-element flat counter inside the tile.
        ctr = jnp.zeros(shape, dtype=jnp.uint32)
        for axis, stride in enumerate(_row_major_strides(shape)):
            idx = lax.broadcasted_iota(jnp.int32, shape, axis).astype(jnp.uint32)
            ctr = ctr + idx * jnp.uint32(stride)

        # Mix seed and grid position so each tile draws an independent mask.
        seed_u = seed_ref[0].astype(jnp.uint32)
        tile_u = pl.program_id(0).astype(jnp.uint32)
        h = ctr * jnp.uint32(0x9E3779B1)
        h = h + seed_u * jnp.uint32(0x85EBCA6B) + tile_u * jnp.uint32(0xC2B2AE35)
        # murmur3 fmix32 finalizer (cheap VPU-only avalanche).
        h = h ^ (h >> jnp.uint32(16))
        h = h * jnp.uint32(0x7FEB352D)
        h = h ^ (h >> jnp.uint32(15))
        h = h * jnp.uint32(0x846CA68B)
        h = h ^ (h >> jnp.uint32(16))

        # Integer-threshold compare: drop iff h < p * 2^32.
        threshold = jnp.uint32(min(int(round(p * (2 ** 32))), 2 ** 32 - 1))
        keep = h >= threshold
        scale = jnp.float32(1.0 / (1.0 - p))
        y = y * jnp.where(keep, scale, jnp.float32(0.0))

    o_ref[...] = y.astype(o_ref.dtype)


def positional_encoding_forward(x, pe_full, seed, *, p=0.1, training=True,
                                block_rows=None,
                                target_block_bytes=2 * 1024 * 1024):
    """Fused (x + pe[:S]) + dropout.  x: (S, B, D) ; pe_full: (max_len, 1, D)."""
    S, B, D = x.shape
    pe = pe_full[:S].astype(x.dtype)            # (S, 1, D) -- glue slice
    seed_arr = jnp.asarray([seed], dtype=jnp.int32)
    itemsize = jnp.dtype(x.dtype).itemsize

    lane_dense = (D % 128 == 0)
    if lane_dense:
        # Realistic d_model: (TS, B, D) blocks are already lane-dense.  pe stays
        # (S, 1, D) in HBM (NOT duplicated across batch) and broadcasts in-kernel.
        xk, pek = x, pe
        row_bytes = B * D * itemsize

        def make_specs(ts):
            return ([pl.BlockSpec((ts, B, D), lambda i: (i, 0, 0)),
                     pl.BlockSpec((ts, 1, D), lambda i: (i, 0, 0))],
                    pl.BlockSpec((ts, B, D), lambda i: (i, 0, 0)))
    else:
        # Small / unaligned d_model (e.g. demo D=32): fold batch into the lane
        # axis so output stores are unmasked (lane-dense) instead of sub-128-lane
        # masked partial stores.  pe is tiled across batch once in HBM; this path
        # is only taken for small D so the extra pe traffic is negligible.
        F = B * D
        xk = x.reshape(S, F)
        pek = jnp.tile(pe, (1, 1, B)).reshape(S, F)
        row_bytes = F * itemsize

        def make_specs(ts):
            return ([pl.BlockSpec((ts, F), lambda i: (i, 0)),
                     pl.BlockSpec((ts, F), lambda i: (i, 0))],
                    pl.BlockSpec((ts, F), lambda i: (i, 0)))

    # Tile rows: ~2 MiB per x block.  With default double buffering this keeps
    # 2 x (x + pe + out) blocks well under the 32 MiB scoped-VMEM limit we
    # request below (also safe against v7x's smaller 64 MiB physical VMEM).
    if block_rows is None:
        ts = max(1, target_block_bytes // max(row_bytes, 1))
    else:
        ts = int(block_rows)
    ts = min(ts, S)
    if ts < S:
        ts = min(S, max(8, (ts // 8) * 8))      # sublane-aligned when tiled
    num_blocks = pl.cdiv(S, ts)

    in_blockspecs, out_blockspec = make_specs(ts)
    kernel = functools.partial(_pos_enc_kernel, p=float(p),
                               apply_dropout=bool(training) and p > 0.0)

    out = pl.pallas_call(
        kernel,
        out_shape=jax.ShapeDtypeStruct(xk.shape, xk.dtype),
        grid=(num_blocks,),
        in_specs=[pl.BlockSpec(memory_space=pltpu.SMEM)] + in_blockspecs,
        out_specs=out_blockspec,
        compiler_params=_CompilerParams(
            dimension_semantics=("parallel",),   # lets v7x shard S-tiles over 2 TCs
            vmem_limit_bytes=32 * 1024 * 1024,
        ),
    )(seed_arr, xk, pek)

    return out.reshape(S, B, D)


def make_pe_buffer(d_model, max_len=5000, dtype=jnp.float32):
    """Deterministic buffer setup, identical math to the PyTorch __init__."""
    position = jnp.arange(0, max_len, dtype=jnp.float32)[:, None]          # (L, 1)
    div_term = jnp.exp(jnp.arange(0, d_model, 2, dtype=jnp.float32)
                       * (-math.log(10000.0) / d_model))                    # (D/2,)
    pe = jnp.zeros((max_len, 1, d_model), dtype=jnp.float32)
    pe = pe.at[:, 0, 0::2].set(jnp.sin(position * div_term))
    pe = pe.at[:, 0, 1::2].set(jnp.cos(position * div_term))
    return pe.astype(dtype)


if __name__ == "__main__":
    d_model, max_len, seq_len, batch = 32, 64, 8, 2

    key = jax.random.PRNGKey(0)
    x = jax.random.normal(key, (seq_len, batch, d_model), dtype=jnp.float32)
    pe_full = make_pe_buffer(d_model, max_len)

    # 1) Eval mode (dropout = identity): must equal x + pe exactly.
    out_eval = jax.block_until_ready(
        positional_encoding_forward(x, pe_full, seed=0, training=False))
    ref = np.asarray(x) + np.asarray(pe_full[:seq_len])
    assert out_eval.shape == x.shape and out_eval.dtype == x.dtype
    assert np.allclose(np.asarray(out_eval), ref, atol=1e-6), "eval-mode mismatch"

    # 2) Training mode: every element must be 0 (dropped) or (x+pe)/(1-p) (kept).
    p = 0.1
    out_train = jax.block_until_ready(
        positional_encoding_forward(x, pe_full, seed=42, training=True, p=p))
    ot = np.asarray(out_train)
    scaled = ref / (1.0 - p)
    ok = np.isclose(ot, 0.0, atol=1e-6) | np.isclose(ot, scaled, rtol=1e-5, atol=1e-6)
    assert ok.all(), "training-mode dropout values inconsistent"
    drop_rate = np.isclose(ot, 0.0, atol=1e-6).mean()
    assert 0.0 < drop_rate < 0.4, f"implausible drop rate {drop_rate}"

    # 3) Lane-dense 3-D path (D % 128 == 0) with a multi-step grid.
    s2, b2, d2 = 16, 2, 128
    x2 = jax.random.normal(jax.random.PRNGKey(1), (s2, b2, d2), dtype=jnp.float32)
    pe2_full = make_pe_buffer(d2, max_len)
    out2 = jax.block_until_ready(
        positional_encoding_forward(x2, pe2_full, seed=0, training=False, block_rows=8))
    ref2 = np.asarray(x2) + np.asarray(pe2_full[:s2])
    assert np.allclose(np.asarray(out2), ref2, atol=1e-6), "3-D path mismatch"

    print("KERNEL_OK")
</pallas_src>

<mosaic_0001>
module attributes {stable_mosaic.version = 11 : i64} {
  func.func @_pos_enc_kernel(%arg0: i32, %arg1: memref<1xi32, #tpu.memory_space<smem>>, %arg2: memref<8x64xf32, #tpu.memory_space<vmem>>, %arg3: memref<8x64xf32, #tpu.memory_space<vmem>>, %arg4: memref<8x64xf32, #tpu.memory_space<vmem>>) attributes {dimension_semantics = [#tpu.dimension_semantics<parallel>], iteration_bounds = array<i64: 1>, scalar_prefetch = 0 : i64, scratch_operands = 0 : i64, tpu.core_type = #tpu.core_type<tc>, window_params = [{transform_indices = @transform_0, window_bounds = array<i64: 1>}, {transform_indices = @transform_1, window_bounds = array<i64: 8, 64>}, {transform_indices = @transform_2, window_bounds = array<i64: 8, 64>}, {transform_indices = @transform_3, window_bounds = array<i64: 8, 64>}]} {
    %c0 = arith.constant 0 : index
    %c0_0 = arith.constant 0 : index
    %0 = vector.load %arg2[%c0, %c0_0] : memref<8x64xf32, #tpu.memory_space<vmem>>, vector<8x64xf32>
    %c0_1 = arith.constant 0 : index
    %c0_2 = arith.constant 0 : index
    %1 = vector.load %arg3[%c0_1, %c0_2] : memref<8x64xf32, #tpu.memory_space<vmem>>, vector<8x64xf32>
    %2 = arith.addf %0, %1 : vector<8x64xf32>
    %c0_3 = arith.constant 0 : index
    %c0_4 = arith.constant 0 : index
    %3 = vector.load %arg4[%c0_3, %c0_4] : memref<8x64xf32, #tpu.memory_space<vmem>>, vector<8x64xf32>
    tpu.vector_store %arg4[%c0_3, %c0_4], %2 {strides = array<i32>} : memref<8x64xf32, #tpu.memory_space<vmem>>, vector<8x64xf32>,
    return
  }
  func.func @transform_0(%arg0: i32) -> i32 {
    %c0_i32 = arith.constant 0 : i32
    %c0_i32_0 = arith.constant 0 : i32
    return %c0_i32 : i32
  }
  func.func @transform_1(%arg0: i32) -> (i32, i32) {
    %c0_i32 = arith.constant 0 : i32
    %c0_i32_0 = arith.constant 0 : i32
    return %arg0, %c0_i32 : i32, i32
  }
  func.func @transform_2(%arg0: i32) -> (i32, i32) {
    %c0_i32 = arith.constant 0 : i32
    %c0_i32_0 = arith.constant 0 : i32
    return %arg0, %c0_i32 : i32, i32
  }
  func.func @transform_3(%arg0: i32) -> (i32, i32) {
    %c0_i32 = arith.constant 0 : i32
    %c0_i32_0 = arith.constant 0 : i32
    return %arg0, %c0_i32 : i32, i32
  }
}

</mosaic_0001>

<llo_original>
// kernel: tpu_custom_call.1
$region0: #{tpu_custom_call.1}
  #allocation0 [shape = 'u32[]', space=smem, size = 0x4, offset = 0x4, fixed_abs, tag = 'smem constant byte address 0x4 - core index']
  #allocation1 [shape = 'u32[144,128]{1,0:T(1,128)}', space=vmem, size = 0x12000, scoped, tag = 'internal scratch']
  #allocation2 [shape = 's32[1]{0:T(128)S(6)}', space=smem, size = 0x200, scoped, tag = 'scoped memory for tpu_custom_call.1']
  %s0 = inlined_call_operand.<no memory space> [shape: s32[1], index: 0, kind: input, shape index: {}]
  %s1 = inlined_call_operand.hbm [shape: f32[8,64], index: 1, kind: input, shape index: {}]
  %s2 = inlined_call_operand.hbm [shape: f32[8,64], index: 2, kind: input, shape index: {}]
  %s3 = inlined_call_operand.hbm [shape: f32[8,64], index: 3, kind: output, shape index: {}]
  %s4 = sld [smem:[#allocation0]]
  $region30: #{tpu_custom_call.1} parent=0
    _
  %s6 = ssub.s32 1, %s4
  %s7 = scalar_select 0, %s6, %s4
  %8 = sst [smem:[#allocation2]] %s0
  $region1: #{tpu_custom_call.1} parent=0
    #allocation3 [shape = 'u8[4096]{0}', space=vmem, size = 0x1000, scoped, tag = 'input window, operand 1, single buffered']
    #allocation4 [shape = 's32[1]{0}', space=sflag, size = 0x4, scoped, tag = 'scoped memory for tpu_custom_call.1']
    #allocation5 [shape = 's32[1]{0}', space=sflag, size = 0x4, scoped, tag = 'scoped memory for tpu_custom_call.1']
    #allocation6 [shape = 'u8[4096]{0}', space=vmem, size = 0x1000, scoped, tag = 'input window, operand 2, single buffered']
    #allocation7 [shape = 's32[1]{0}', space=sflag, size = 0x4, scoped, tag = 'scoped memory for tpu_custom_call.1']
    #allocation8 [shape = 'u8[4096]{0}', space=vmem, size = 0x1000, scoped, tag = 'output window, operand 0, single buffered']
    %9 = vsyncpa [#allocation4], 0
    %10 = vsyncpa [#allocation7], 0
    %11 = vsyncpa [#allocation5], 0
    // Predicated region
    $region2: #{tpu_custom_call.1} parent=1 // pred_check
      _
    $region3: #{tpu_custom_call.1} parent=1 // pred_check_branch
      %13 = sbr.rel (0) target = $region5
    $region4: #{tpu_custom_call.1} parent=1 // pred_region
      _
    $region5: #{tpu_custom_call.1} parent=1 // pred_fallthru
      _
    // Predicated region
    $region6: #{tpu_custom_call.1} parent=1 // pred_check
      _
    $region7: #{tpu_custom_call.1} parent=1 // pred_check_branch
      %15 = sbr.rel (0) target = $region9
    $region8: #{tpu_custom_call.1} parent=1 // pred_region
      %s17 = ssub.s32 128, 128
      %18 = vsyncadd [#allocation4], %s17
      %s20 = sshll.u32 [#allocation3], 4
      %s21 = int_to_ptr.vmem [resolvable:$true] %s20
      %23 = dma.hbm_to_vmem [thread:$0]  %s1, 128, %s21, [#allocation4]
    $region9: #{tpu_custom_call.1} parent=1 // pred_fallthru
      _
    // Predicated region
    $region10: #{tpu_custom_call.1} parent=1 // pred_check
      _
    $region11: #{tpu_custom_call.1} parent=1 // pred_check_branch
      %25 = sbr.rel (0) target = $region13
    $region12: #{tpu_custom_call.1} parent=1 // pred_region
      %s27 = ssub.s32 128, 128
      %28 = vsyncadd [#allocation7], %s27
      %s30 = sshll.u32 [#allocation6], 4
      %s31 = int_to_ptr.vmem [resolvable:$true] %s30
      %33 = dma.hbm_to_vmem [thread:$0]  %s2, 128, %s31, [#allocation7]
    $region13: #{tpu_custom_call.1} parent=1 // pred_fallthru
      _
    // Predicated region
    $region14: #{tpu_custom_call.1} parent=1 // pred_check
      _
    $region15: #{tpu_custom_call.1} parent=1 // pred_check_branch
      %35 = sbr.rel (0) target = $region17
    $region16: #{tpu_custom_call.1} parent=1 // pred_region
      %36 = dma.done [#allocation4], 128
    $region17: #{tpu_custom_call.1} parent=1 // pred_fallthru
      _
    // Predicated region
    $region18: #{tpu_custom_call.1} parent=1 // pred_check
      _
    $region19: #{tpu_custom_call.1} parent=1 // pred_check_branch
      %38 = sbr.rel (0) target = $region21
    $region20: #{tpu_custom_call.1} parent=1 // pred_region
      %39 = dma.done [#allocation7], 128
    $region21: #{tpu_custom_call.1} parent=1 // pred_fallthru
      _
    %v40 = vld [vmem:[#allocation3] sm:$0xff]
    %v41 = vld [vmem:[#allocation6] sm:$0xff]
    %v42 = vadd.f32 %v40, %v41
    %vm43 = vcmask 523264
    %44 = vst.msk [vmem:[#allocation8] sm:$0xff] %vm43, %v42
    // Predicated region
    $region22: #{tpu_custom_call.1} parent=1 // pred_check
      _
    $region23: #{tpu_custom_call.1} parent=1 // pred_check_branch
      %46 = sbr.rel (0) target = $region25
    $region24: #{tpu_custom_call.1} parent=1 // pred_region
      %s48 = ssub.s32 128, 128
      %49 = vsyncadd [#allocation5], %s48
      %s51 = sshll.u32 [#allocation8], 4
      %s52 = int_to_ptr.vmem [resolvable:$true] %s51
      %54 = dma.vmem_to_hbm [thread:$0]  %s52, 128, %s3, [#allocation5]
    $region25: #{tpu_custom_call.1} parent=1 // pred_fallthru
      _
    // Predicated region
    $region26: #{tpu_custom_call.1} parent=1 // pred_check
      _
    $region27: #{tpu_custom_call.1} parent=1 // pred_check_branch
      %56 = sbr.rel (0) target = $region29
    $region28: #{tpu_custom_call.1} parent=1 // pred_region
      %57 = dma.done [#allocation5], 128
    $region29: #{tpu_custom_call.1} parent=1 // pred_fallthru
      _
    %58 = vsyncpa [#allocation4], 1
    %59 = vsyncpa [#allocation7], 1
    %60 = vsyncpa [#allocation5], 1

</llo_original>
